<compile_context>
chip_gen: v5e
topology: v5e:2x2
jax: 0.10.0
libtpu: 0.0.40
codegen_flags: <defaults>
</compile_context>

<pallas_src>
import functools

import jax
import jax.numpy as jnp
from jax import lax
from jax.experimental import pallas as pl
from jax.experimental.pallas import tpu as pltpu


def _round_up(x, m):
    return ((x + m - 1) // m) * m


_TB_MAX = 512  # per-step batch tile; big enough to amortize pipeline overhead


def _choose_tile(batch):
    """Pick (TB, B_pad): TB multiple of 16 (bf16 sublane packing); for
    mid/large batches keep >= 2 grid steps so v7x can use both TensorCores."""
    b_r = _round_up(max(batch, 1), 16)
    if b_r >= 2 * _TB_MAX:
        tb = _TB_MAX
    elif b_r >= 256:
        tb = _round_up((b_r + 1) // 2, 16)   # exactly 2 grid steps
    else:
        tb = b_r                              # single step (tiny batch)
    b_pad = _round_up(b_r, tb)
    return tb, b_pad


def acer_kernel(state_ref, w1_ref, b1_ref, w2_ref, b2_ref, out_ref, *, action_dim):
    A = action_dim
    x = state_ref[...]                                           # (TB, S) bf16

    # ----- fused layer 1: [h_actor | h_critic] in one bf16 MXU pass -----
    h = jnp.tanh(
        jnp.dot(x, w1_ref[...], preferred_element_type=jnp.float32)
        + b1_ref[...])                                           # (TB, 2H) f32

    # ----- fused layer 2: block-diagonal, lane-padded W2 (bf16 MXU) -----
    #   y[:, 0:A) = actor logits,  y[:, A:2A) = critic q,  rest exact zeros
    y = (jnp.dot(h.astype(jnp.bfloat16), w2_ref[...],
                 preferred_element_type=jnp.float32)
         + b2_ref[...])                                          # (TB, OUT_W) f32

    lane = lax.broadcasted_iota(jnp.int32, y.shape, 1)
    pol_mask = lane < A
    q_mask = (lane >= A) & (lane < 2 * A)

    # masked softmax over the policy lanes (full 128-lane width)
    logits = jnp.where(pol_mask, y, jnp.float32(-1e30))
    m = jnp.max(logits, axis=-1, keepdims=True)
    e = jnp.exp(logits - m)                    # exactly 0 on non-policy lanes
    denom = jnp.sum(e, axis=-1, keepdims=True)
    policy = e / denom                         # exact divide ((TB,1) denom)
    # .clamp(max=1 - 1e-20) is a no-op in f32 (constant rounds to 1.0) -> dropped

    q = jnp.where(q_mask, y, 0.0)              # q values, zeros elsewhere

    # value = sum_a policy[a] * q[a]; align via static lane slices (no roll)
    value = jnp.sum(policy[:, :A] * y[:, A:2 * A], axis=-1, keepdims=True)

    # single unmasked lane-dense store: [policy | q | value | zeros]
    out_ref[...] = (policy + q
                    + jnp.where(lane == 2 * A, value, 0.0)).astype(out_ref.dtype)


def pack_params(p):
    """Pack actor/critic weights into fused arrays (once, outside step loop).
    Matmul operands (w1, w2) are stored in bf16 for the MXU; biases stay f32."""
    w1a, b1a, w2a, b2a = p["w1a"], p["b1a"], p["w2a"], p["b2a"]
    w1c, b1c, w2c, b2c = p["w1c"], p["b1c"], p["w2c"], p["b2c"]
    S, H = w1a.shape
    A = w2a.shape[1]
    out_w = max(128, _round_up(2 * A + 1, 128))   # lane-dense output width

    w1 = jnp.concatenate([w1a, w1c], axis=1).astype(jnp.bfloat16)   # (S, 2H)
    b1 = jnp.concatenate([b1a, b1c], axis=1).astype(jnp.float32)    # (1, 2H)

    w2 = jnp.zeros((2 * H, out_w), jnp.float32)
    w2 = w2.at[:H, :A].set(w2a).at[H:, A:2 * A].set(w2c)            # block diag
    w2 = w2.astype(jnp.bfloat16)
    b2 = jnp.zeros((1, out_w), jnp.float32)
    b2 = b2.at[:, :A].set(b2a).at[:, A:2 * A].set(b2c)

    return dict(w1=w1, b1=b1, w2=w2, b2=b2, action_dim=A, out_w=out_w)


def acer_forward(state, packed):
    """state: (B, state_dim) f32.  packed: output of pack_params.
    Returns (policy, q_value, value) as f32, matching the PyTorch module.
    NOTE: for very small batches (B < ~64) a plain fused XLA path would beat
    the standalone kernel; we keep the kernel path for demonstration."""
    B, S = state.shape
    A = packed["action_dim"]
    OUT_W = packed["out_w"]
    H2 = packed["w1"].shape[1]

    TB, B_pad = _choose_tile(B)
    x = state.astype(jnp.bfloat16)            # halve state HBM->VMEM traffic
    if B_pad != B:
        x = jnp.pad(x, ((0, B_pad - B), (0, 0)))

    kernel = functools.partial(acer_kernel, action_dim=A)

    out = pl.pallas_call(
        kernel,
        out_shape=jax.ShapeDtypeStruct((B_pad, OUT_W), jnp.bfloat16),
        grid_spec=pltpu.PrefetchScalarGridSpec(
            num_scalar_prefetch=0,
            grid=(B_pad // TB,),
            in_specs=[
                pl.BlockSpec((TB, S), lambda i: (i, 0)),      # state tile (bf16)
                pl.BlockSpec((S, H2), lambda i: (0, 0)),      # fused W1 (resident)
                pl.BlockSpec((1, H2), lambda i: (0, 0)),      # fused b1 (f32)
                pl.BlockSpec((H2, OUT_W), lambda i: (0, 0)),  # block-diag W2
                pl.BlockSpec((1, OUT_W), lambda i: (0, 0)),   # fused b2 (f32)
            ],
            out_specs=pl.BlockSpec((TB, OUT_W), lambda i: (i, 0)),
        ),
        compiler_params=pltpu.CompilerParams(
            dimension_semantics=("parallel",)),
    )(x, packed["w1"], packed["b1"], packed["w2"], packed["b2"])

    out = out.astype(jnp.float32)
    policy = out[:B, :A]
    q_value = out[:B, A:2 * A]
    value = out[:B, 2 * A:2 * A + 1]
    return policy, q_value, value


def init_params(key, state_dim, action_dim, hidden=256):
    """PyTorch-style Linear init U(-1/sqrt(fan_in), 1/sqrt(fan_in)).
    Weights stored as (in_features, out_features), f32."""
    ks = jax.random.split(key, 8)

    def lin(kw, kb, fan_in, fan_out):
        bound = 1.0 / jnp.sqrt(jnp.float32(fan_in))
        w = jax.random.uniform(kw, (fan_in, fan_out), jnp.float32, -bound, bound)
        b = jax.random.uniform(kb, (1, fan_out), jnp.float32, -bound, bound)
        return w, b

    w1a, b1a = lin(ks[0], ks[1], state_dim, hidden)
    w2a, b2a = lin(ks[2], ks[3], hidden, action_dim)
    w1c, b1c = lin(ks[4], ks[5], state_dim, hidden)
    w2c, b2c = lin(ks[6], ks[7], hidden, action_dim)
    return dict(w1a=w1a, b1a=b1a, w2a=w2a, b2a=b2a,
                w1c=w1c, b1c=b1c, w2c=w2c, b2c=b2c)


def reference_forward(state, p):
    """Plain-JAX f32 reference mirroring the PyTorch module."""
    h_a = jnp.tanh(state @ p["w1a"] + p["b1a"])
    logits = h_a @ p["w2a"] + p["b2a"]
    policy = jax.nn.softmax(logits, axis=-1)
    policy = jnp.minimum(policy, jnp.float32(1.0 - 1e-20))   # no-op in f32
    h_c = jnp.tanh(state @ p["w1c"] + p["b1c"])
    q = h_c @ p["w2c"] + p["b2c"]
    value = jnp.sum(policy * q, axis=-1, keepdims=True)
    return policy, q, value


if __name__ == "__main__":
    B, STATE_DIM, ACTION_DIM = 8, 32, 8

    key = jax.random.PRNGKey(0)
    k_state, k_params = jax.random.split(key)

    state = jax.random.normal(k_state, (B, STATE_DIM), dtype=jnp.float32)
    params = init_params(k_params, STATE_DIM, ACTION_DIM)
    packed = pack_params(params)

    policy, q_value, value = acer_forward(state, packed)
    jax.block_until_ready((policy, q_value, value))

    # parity check vs the f32 reference; tolerances relaxed for the bf16 MXU path
    ref_policy, ref_q, ref_value = reference_forward(state, params)
    assert policy.shape == (B, ACTION_DIM)
    assert q_value.shape == (B, ACTION_DIM)
    assert value.shape == (B, 1)
    assert jnp.allclose(policy, ref_policy, atol=2e-2), "policy mismatch"
    assert jnp.allclose(q_value, ref_q, atol=5e-2), "q_value mismatch"
    assert jnp.allclose(value, ref_value, atol=5e-2), "value mismatch"

    print("KERNEL_OK")
</pallas_src>

<mosaic_0001>
module attributes {stable_mosaic.version = 11 : i64} {
  func.func @acer_kernel(%arg0: i32, %arg1: memref<16x32xbf16, #tpu.memory_space<vmem>>, %arg2: memref<32x512xbf16, #tpu.memory_space<vmem>>, %arg3: memref<1x512xf32, #tpu.memory_space<vmem>>, %arg4: memref<512x128xbf16, #tpu.memory_space<vmem>>, %arg5: memref<1x128xf32, #tpu.memory_space<vmem>>, %arg6: memref<16x128xbf16, #tpu.memory_space<vmem>>) attributes {dimension_semantics = [#tpu.dimension_semantics<parallel>], iteration_bounds = array<i64: 1>, scalar_prefetch = 0 : i64, scratch_operands = 0 : i64, tpu.core_type = #tpu.core_type<tc>, window_params = [{transform_indices = @transform_0, window_bounds = array<i64: 16, 32>}, {pipeline_mode = #tpu.pipeline_mode<synchronous>, transform_indices = @transform_1, window_bounds = array<i64: 32, 512>}, {pipeline_mode = #tpu.pipeline_mode<synchronous>, transform_indices = @transform_2, window_bounds = array<i64: 1, 512>}, {pipeline_mode = #tpu.pipeline_mode<synchronous>, transform_indices = @transform_3, window_bounds = array<i64: 512, 128>}, {pipeline_mode = #tpu.pipeline_mode<synchronous>, transform_indices = @transform_4, window_bounds = array<i64: 1, 128>}, {transform_indices = @transform_5, window_bounds = array<i64: 16, 128>}]} {
    %c0 = arith.constant 0 : index
    %c0_0 = arith.constant 0 : index
    %0 = vector.load %arg1[%c0, %c0_0] : memref<16x32xbf16, #tpu.memory_space<vmem>>, vector<16x32xbf16>
    %c0_1 = arith.constant 0 : index
    %c0_2 = arith.constant 0 : index
    %1 = vector.load %arg2[%c0_1, %c0_2] : memref<32x512xbf16, #tpu.memory_space<vmem>>, vector<32x512xbf16>
    %cst = arith.constant dense<0.000000e+00> : vector<16x512xf32>
    %2 = tpu.matmul %0, %1, %cst {dimension_numbers = #tpu.dot_dimension_numbers<[1], [0], [0], [1], [0, 0, 1, 1], [], []>} : vector<16x32xbf16>, vector<32x512xbf16>, vector<16x512xf32> -> vector<16x512xf32>
    %c0_3 = arith.constant 0 : index
    %c0_4 = arith.constant 0 : index
    %3 = vector.load %arg3[%c0_3, %c0_4] : memref<1x512xf32, #tpu.memory_space<vmem>>, vector<1x512xf32>
    %4 = vector.broadcast %3 : vector<1x512xf32> to vector<16x512xf32>
    %5 = arith.addf %2, %4 : vector<16x512xf32>
    %6 = math.tanh %5 : vector<16x512xf32>
    %7 = arith.truncf %6 : vector<16x512xf32> to vector<16x512xbf16>
    %c0_5 = arith.constant 0 : index
    %c0_6 = arith.constant 0 : index
    %8 = vector.load %arg4[%c0_5, %c0_6] : memref<512x128xbf16, #tpu.memory_space<vmem>>, vector<512x128xbf16>
    %cst_7 = arith.constant dense<0.000000e+00> : vector<16x128xf32>
    %9 = tpu.matmul %7, %8, %cst_7 {dimension_numbers = #tpu.dot_dimension_numbers<[1], [0], [0], [1], [0, 0, 1, 1], [], []>} : vector<16x512xbf16>, vector<512x128xbf16>, vector<16x128xf32> -> vector<16x128xf32>
    %c0_8 = arith.constant 0 : index
    %c0_9 = arith.constant 0 : index
    %10 = vector.load %arg5[%c0_8, %c0_9] : memref<1x128xf32, #tpu.memory_space<vmem>>, vector<1x128xf32>
    %11 = vector.broadcast %10 : vector<1x128xf32> to vector<16x128xf32>
    %12 = arith.addf %9, %11 : vector<16x128xf32>
    %13 = tpu.iota {dimensions = array<i32: 1>} : vector<16x128xi32>
    %c8_i32 = arith.constant 8 : i32
    %14 = vector.broadcast %c8_i32 : i32 to vector<16x128xi32>
    %15 = arith.cmpi slt, %13, %14 : vector<16x128xi32>
    %c8_i32_10 = arith.constant 8 : i32
    %16 = vector.broadcast %c8_i32_10 : i32 to vector<16x128xi32>
    %17 = arith.cmpi sge, %13, %16 : vector<16x128xi32>
    %c16_i32 = arith.constant 16 : i32
    %18 = vector.broadcast %c16_i32 : i32 to vector<16x128xi32>
    %19 = arith.cmpi slt, %13, %18 : vector<16x128xi32>
    %20 = arith.andi %17, %19 : vector<16x128xi1>
    %cst_11 = arith.constant -1.000000e+30 : f32
    %21 = vector.broadcast %cst_11 : f32 to vector<16x128xf32>
    %22 = arith.select %15, %12, %21 : vector<16x128xi1>, vector<16x128xf32>
    %cst_12 = arith.constant dense<0xFF800000> : vector<16xf32>
    %23 = vector.multi_reduction <maximumf>, %22, %cst_12 [1] : vector<16x128xf32> to vector<16xf32>
    %24 = vector.shape_cast %23 : vector<16xf32> to vector<16x1xf32>
    %25 = vector.broadcast %24 : vector<16x1xf32> to vector<16x128xf32>
    %26 = arith.subf %22, %25 : vector<16x128xf32>
    %27 = math.exp %26 : vector<16x128xf32>
    %cst_13 = arith.constant dense<0.000000e+00> : vector<16xf32>
    %28 = vector.multi_reduction <add>, %27, %cst_13 [1] : vector<16x128xf32> to vector<16xf32>
    %29 = vector.shape_cast %28 : vector<16xf32> to vector<16x1xf32>
    %30 = vector.broadcast %29 : vector<16x1xf32> to vector<16x128xf32>
    %31 = arith.divf %27, %30 : vector<16x128xf32>
    %cst_14 = arith.constant 0.000000e+00 : f32
    %32 = vector.broadcast %cst_14 : f32 to vector<16x128xf32>
    %33 = arith.select %20, %12, %32 : vector<16x128xi1>, vector<16x128xf32>
    %34 = vector.extract_strided_slice %31 {offsets = [0, 0], sizes = [16, 8], strides = [1, 1]} : vector<16x128xf32> to vector<16x8xf32>
    %35 = vector.extract_strided_slice %12 {offsets = [0, 8], sizes = [16, 8], strides = [1, 1]} : vector<16x128xf32> to vector<16x8xf32>
    %36 = arith.mulf %34, %35 : vector<16x8xf32>
    %cst_15 = arith.constant dense<0.000000e+00> : vector<16xf32>
    %37 = vector.multi_reduction <add>, %36, %cst_15 [1] : vector<16x8xf32> to vector<16xf32>
    %38 = vector.shape_cast %37 : vector<16xf32> to vector<16x1xf32>
    %39 = arith.addf %31, %33 : vector<16x128xf32>
    %c16_i32_16 = arith.constant 16 : i32
    %40 = vector.broadcast %c16_i32_16 : i32 to vector<16x128xi32>
    %41 = arith.cmpi eq, %13, %40 : vector<16x128xi32>
    %cst_17 = arith.constant 0.000000e+00 : f32
    %42 = vector.shape_cast %38 : vector<16x1xf32> to vector<16x1xf32>
    %43 = vector.broadcast %42 : vector<16x1xf32> to vector<16x128xf32>
    %44 = vector.broadcast %cst_17 : f32 to vector<16x128xf32>
    %45 = arith.select %41, %43, %44 : vector<16x128xi1>, vector<16x128xf32>
    %46 = arith.addf %39, %45 : vector<16x128xf32>
    %47 = arith.truncf %46 : vector<16x128xf32> to vector<16x128xbf16>
    %c0_18 = arith.constant 0 : index
    %c0_19 = arith.constant 0 : index
    %48 = vector.load %arg6[%c0_18, %c0_19] : memref<16x128xbf16, #tpu.memory_space<vmem>>, vector<16x128xbf16>
    tpu.vector_store %arg6[%c0_18, %c0_19], %47 {strides = array<i32>} : memref<16x128xbf16, #tpu.memory_space<vmem>>, vector<16x128xbf16>,
    return
  }
  func.func @transform_0(%arg0: i32) -> (i32, i32) {
    %c0_i32 = arith.constant 0 : i32
    %c0_i32_0 = arith.constant 0 : i32
    return %arg0, %c0_i32 : i32, i32
  }
  func.func @transform_1(%arg0: i32) -> (i32, i32) {
    %c0_i32 = arith.constant 0 : i32
    %c0_i32_0 = arith.constant 0 : i32
    %c0_i32_1 = arith.constant 0 : i32
    return %c0_i32, %c0_i32_0 : i32, i32
  }
  func.func @transform_2(%arg0: i32) -> (i32, i32) {
    %c0_i32 = arith.constant 0 : i32
    %c0_i32_0 = arith.constant 0 : i32
    %c0_i32_1 = arith.constant 0 : i32
    return %c0_i32, %c0_i32_0 : i32, i32
  }
  func.func @transform_3(%arg0: i32) -> (i32, i32) {
    %c0_i32 = arith.constant 0 : i32
    %c0_i32_0 = arith.constant 0 : i32
    %c0_i32_1 = arith.constant 0 : i32
    return %c0_i32, %c0_i32_0 : i32, i32
  }
  func.func @transform_4(%arg0: i32) -> (i32, i32) {
    %c0_i32 = arith.constant 0 : i32
    %c0_i32_0 = arith.constant 0 : i32
    %c0_i32_1 = arith.constant 0 : i32
    return %c0_i32, %c0_i32_0 : i32, i32
  }
  func.func @transform_5(%arg0: i32) -> (i32, i32) {
    %c0_i32 = arith.constant 0 : i32
    %c0_i32_0 = arith.constant 0 : i32
    return %arg0, %c0_i32 : i32, i32
  }
}

</mosaic_0001>

<llo_original>
// kernel: tpu_custom_call.1
$region0: #{tpu_custom_call.1}
  #allocation0 [shape = 'u32[]', space=smem, size = 0x4, offset = 0x4, fixed_abs, tag = 'smem constant byte address 0x4 - core index']
  #allocation1 [shape = 'u32[72,128]{1,0:T(1,128)}', space=vmem, size = 0x9000, scoped, tag = 'internal scratch']
  %s0 = inlined_call_operand.hbm [shape: bf16[16,32], index: 0, kind: input, shape index: {}]
  %s1 = inlined_call_operand.hbm [shape: bf16[32,512], index: 1, kind: input, shape index: {}]
  %s2 = inlined_call_operand.hbm [shape: f32[1,512], index: 2, kind: input, shape index: {}]
  %s3 = inlined_call_operand.hbm [shape: bf16[512,128], index: 3, kind: input, shape index: {}]
  %s4 = inlined_call_operand.vmem [shape: f32[1,128], index: 4, kind: input, shape index: {}]
  %s5 = inlined_call_operand.hbm [shape: bf16[16,128], index: 5, kind: output, shape index: {}]
  %s6 = sld [smem:[#allocation0]]
  $region46: #{tpu_custom_call.1} parent=0
    _
  %s8 = ssub.s32 1, %s6
  %s9 = scalar_select 0, %s8, %s6
  $region1: #{tpu_custom_call.1} parent=0
    #allocation2 [shape = 'u8[4096]{0}', space=vmem, size = 0x1000, scoped, tag = 'input window, operand 0, single buffered']
    #allocation3 [shape = 's32[1]{0}', space=sflag, size = 0x4, scoped, tag = 'scoped memory for tpu_custom_call.1']
    #allocation4 [shape = 's32[1]{0}', space=sflag, size = 0x4, scoped, tag = 'scoped memory for tpu_custom_call.1']
    #allocation5 [shape = 'u8[32768]{0}', space=vmem, size = 0x8000, scoped, tag = 'input window, operand 1, single buffered']
    #allocation6 [shape = 's32[1]{0}', space=sflag, size = 0x4, scoped, tag = 'scoped memory for tpu_custom_call.1']
    #allocation7 [shape = 'u8[2048]{0}', space=vmem, size = 0x800, scoped, tag = 'input window, operand 2, single buffered']
    #allocation8 [shape = 'u8[131072]{0}', space=vmem, size = 0x20000, scoped, tag = 'input window, operand 3, single buffered']
    #allocation9 [shape = 's32[1]{0}', space=sflag, size = 0x4, scoped, tag = 'scoped memory for tpu_custom_call.1']
    #allocation10 [shape = 'u8[4096]{0}', space=vmem, size = 0x1000, scoped, tag = 'output window, operand 0, single buffered']
    %10 = vsyncpa [#allocation3], 0
    %11 = vsyncpa [#allocation6], 0
    %12 = vsyncpa [#allocation9], 0
    %13 = vsyncpa [#allocation4], 0
    // Predicated region
    $region2: #{tpu_custom_call.1} parent=1 // pred_check
      _
    $region3: #{tpu_custom_call.1} parent=1 // pred_check_branch
      %15 = sbr.rel (0) target = $region5
    $region4: #{tpu_custom_call.1} parent=1 // pred_region
      %17 = vsyncadd [#allocation3], 0
      %s18 = sshll.u32 %s0, 4
      %s19 = int_to_ptr.hbm [resolvable:$true] %s18
      %s20 = sshll.u32 [#allocation2], 4
      %s21 = int_to_ptr.vmem [resolvable:$true] %s20
      %26 = dma.hbm_to_vmem [thread:$0]  %s19, 128, %s21, [#allocation3], 64, 64, 4
    $region5: #{tpu_custom_call.1} parent=1 // pred_fallthru
      _
    // Predicated region
    $region6: #{tpu_custom_call.1} parent=1 // pred_check
      _
    $region7: #{tpu_custom_call.1} parent=1 // pred_check_branch
      %28 = sbr.rel (0) target = $region9
    $region8: #{tpu_custom_call.1} parent=1 // pred_region
      %30 = vsyncadd [#allocation6], 0
      %s31 = sshll.u32 %s1, 4
      %s32 = int_to_ptr.hbm [resolvable:$true] %s31
      %s33 = sshll.u32 [#allocation5], 4
      %s34 = int_to_ptr.vmem [resolvable:$true] %s33
      %39 = dma.hbm_to_vmem [thread:$0]  %s32, 1024, %s34, [#allocation6], 256, 256, 16
    $region9: #{tpu_custom_call.1} parent=1 // pred_fallthru
      _
    // Predicated region
    $region10: #{tpu_custom_call.1} parent=1 // pred_check
      _
    $region11: #{tpu_custom_call.1} parent=1 // pred_check_branch
      %41 = sbr.rel (0) target = $region13
    $region12: #{tpu_custom_call.1} parent=1 // pred_region
      %43 = vsyncadd [#allocation6], 0
      %s45 = sshll.u32 %s2, 4
      %s46 = int_to_ptr.hbm [resolvable:$true] %s45
      %s47 = sshll.u32 [#allocation7], 4
      %s48 = int_to_ptr.vmem [resolvable:$true] %s47
      %50 = dma.hbm_to_vmem [thread:$0]  %s46, 64, %s48, [#allocation6]
    $region13: #{tpu_custom_call.1} parent=1 // pred_fallthru
      _
    // Predicated region
    $region14: #{tpu_custom_call.1} parent=1 // pred_check
      _
    $region15: #{tpu_custom_call.1} parent=1 // pred_check_branch
      %52 = sbr.rel (0) target = $region17
    $region16: #{tpu_custom_call.1} parent=1 // pred_region
      %54 = vsyncadd [#allocation9], 0
      %s55 = sshll.u32 %s3, 4
      %s56 = int_to_ptr.hbm [resolvable:$true] %s55
      %s57 = sshll.u32 [#allocation8], 4
      %s58 = int_to_ptr.vmem [resolvable:$true] %s57
      %63 = dma.hbm_to_vmem [thread:$0]  %s56, 4096, %s58, [#allocation9], 64, 64, 4
    $region17: #{tpu_custom_call.1} parent=1 // pred_fallthru
      _
    // Predicated region
    $region18: #{tpu_custom_call.1} parent=1 // pred_check
      _
    $region19: #{tpu_custom_call.1} parent=1 // pred_check_branch
      %65 = sbr.rel (0) target = $region21
    $region20: #{tpu_custom_call.1} parent=1 // pred_region
      _
    $region21: #{tpu_custom_call.1} parent=1 // pred_fallthru
      _
    // Predicated region
    $region22: #{tpu_custom_call.1} parent=1 // pred_check
      _
    $region23: #{tpu_custom_call.1} parent=1 // pred_check_branch
      %67 = sbr.rel (0) target = $region25
    $region24: #{tpu_custom_call.1} parent=1 // pred_region
      %69 = dma.done [#allocation3], 128
    $region25: #{tpu_custom_call.1} parent=1 // pred_fallthru
      _
    // Predicated region
    $region26: #{tpu_custom_call.1} parent=1 // pred_check
      _
    $region27: #{tpu_custom_call.1} parent=1 // pred_check_branch
      %71 = sbr.rel (0) target = $region29
    $region28: #{tpu_custom_call.1} parent=1 // pred_region
      %73 = dma.done [#allocation6], 1024
    $region29: #{tpu_custom_call.1} parent=1 // pred_fallthru
      _
    // Predicated region
    $region30: #{tpu_custom_call.1} parent=1 // pred_check
      _
    $region31: #{tpu_custom_call.1} parent=1 // pred_check_branch
      %75 = sbr.rel (0) target = $region33
    $region32: #{tpu_custom_call.1} parent=1 // pred_region
      %77 = dma.done [#allocation6], 64
    $region33: #{tpu_custom_call.1} parent=1 // pred_fallthru
      _
    // Predicated region
    $region34: #{tpu_custom_call.1} parent=1 // pred_check
      _
    $region35: #{tpu_custom_call.1} parent=1 // pred_check_branch
      %79 = sbr.rel (0) target = $region37
    $region36: #{tpu_custom_call.1} parent=1 // pred_region
      %81 = dma.done [#allocation9], 4096
    $region37: #{tpu_custom_call.1} parent=1 // pred_fallthru
      _
    %v83 = vld [vmem:[#allocation2] sm:$0xf]
    %v84 = vld [vmem:[#allocation2 + $0x4] sm:$0xf]
    %v85 = vld [vmem:[#allocation5] sm:$0xff]
    %v86 = vld [vmem:[#allocation5 + $0x8] sm:$0xff]
    %v87 = vld [vmem:[#allocation5 + $0x10] sm:$0xff]
    %v88 = vld [vmem:[#allocation5 + $0x18] sm:$0xff]
    %v89 = vld [vmem:[#allocation5 + $0x20] sm:$0xff]
    %v90 = vld [vmem:[#allocation5 + $0x28] sm:$0xff]
    %v91 = vld [vmem:[#allocation5 + $0x30] sm:$0xff]
    %v92 = vld [vmem:[#allocation5 + $0x38] sm:$0xff]
    %v93 = vld [vmem:[#allocation7] sm:$0xf]
    %v95 = vperm.slane %v93, 0
    %v96 = vperm.slane %v93, 1
    %v97 = vperm.slane %v93, 2
    %v98 = vperm.slane %v93, 3
    %v105 = vunpack.c.l.b16 %v83
    %v106 = vunpack.c.l.b16 %v84
    %v107 = vpack.c.b16 %v106, %v105
    %v116 = vunpack.c.l.b16 %v85
    %v117 = vunpack.c.h.b16 %v85
    %v118 = vunpack.c.l.b16 %v86
    %v119 = vunpack.c.h.b16 %v86
    %v120 = vunpack.c.l.b16 %v87
    %v121 = vunpack.c.h.b16 %v87
    %v122 = vunpack.c.l.b16 %v88
    %v123 = vunpack.c.h.b16 %v88
    %v124 = vunpack.c.l.b16 %v89
    %v125 = vunpack.c.h.b16 %v89
    %v126 = vunpack.c.l.b16 %v90
    %v127 = vunpack.c.h.b16 %v90
    %v128 = vunpack.c.l.b16 %v91
    %v129 = vunpack.c.h.b16 %v91
    %v130 = vunpack.c.l.b16 %v92
    %v131 = vunpack.c.h.b16 %v92
    %v132 = vpack.c.b16 %v120, %v116
    %v133 = vpack.c.b16 %v121, %v117
    %v134 = vpack.c.b16 %v122, %v118
    %v135 = vpack.c.b16 %v123, %v119
    %v136 = vpack.c.b16 %v128, %v124
    %v137 = vpack.c.b16 %v129, %v125
    %v138 = vpack.c.b16 %v130, %v126
    %v139 = vpack.c.b16 %v131, %v127
    %vm148 = vcmask 261120
    %v150 = vsel %vm148, %v107, 0
    %152 = vmatpush.bf16.msra.mxu0 0
    %153 = vmatpush.bf16.msra.mxu0 0
    %154 = vmatpush.bf16.msra.mxu0 0
    %155 = vmatpush.bf16.msra.mxu0 0
    %156 = vmatpush.bf16.msra.mxu0 0
    %157 = vmatpush.bf16.msra.mxu0 0
    %158 = vmatpush.bf16.msra.mxu0 %v136
    %159 = vmatpush.bf16.msra.mxu0 %v132
    %160 = vmatmul.bf16.gmra.mxu0 %v150
    %v161 = vpop.f32.mrf.mxu0
    %v162 = vadd.f32 %v95, %v161
    %v163 = vpop.f32.mrf.mxu0
    %v164 = vadd.f32 %v95, %v163
    %165 = vdwg.mxu0
    %166 = vmatpush.bf16.msra.mxu0 0
    %167 = vmatpush.bf16.msra.mxu0 0
    %168 = vmatpush.bf16.msra.mxu0 0
    %169 = vmatpush.bf16.msra.mxu0 0
    %170 = vmatpush.bf16.msra.mxu0 0
    %171 = vmatpush.bf16.msra.mxu0 0
    %172 = vmatpush.bf16.msra.mxu0 %v137
    %173 = vmatpush.bf16.msra.mxu0 %v133
    %174 = vmatmul.bf16.gmra.mxu0 %v150
    %v175 = vpop.f32.mrf.mxu0
    %v176 = vadd.f32 %v96, %v175
    %v177 = vpop.f32.mrf.mxu0
    %v178 = vadd.f32 %v96, %v177
    %179 = vdwg.mxu0
    %180 = vmatpush.bf16.msra.mxu0 0
    %181 = vmatpush.bf16.msra.mxu0 0
    %182 = vmatpush.bf16.msra.mxu0 0
    %183 = vmatpush.bf16.msra.mxu0 0
    %184 = vmatpush.bf16.msra.mxu0 0
    %185 = vmatpush.bf16.msra.mxu0 0
    %186 = vmatpush.bf16.msra.mxu0 %v138
    %187 = vmatpush.bf16.msra.mxu0 %v134
    %188 = vmatmul.bf16.gmra.mxu0 %v150
    %v189 = vpop.f32.mrf.mxu0
    %v190 = vadd.f32 %v97, %v189
    %v191 = vpop.f32.mrf.mxu0
    %v192 = vadd.f32 %v97, %v191
    %193 = vdwg.mxu0
    %194 = vmatpush.bf16.msra.mxu0 0
    %195 = vmatpush.bf16.msra.mxu0 0
    %196 = vmatpush.bf16.msra.mxu0 0
    %197 = vmatpush.bf16.msra.mxu0 0
    %198 = vmatpush.bf16.msra.mxu0 0
    %199 = vmatpush.bf16.msra.mxu0 0
    %200 = vmatpush.bf16.msra.mxu0 %v139
    %201 = vmatpush.bf16.msra.mxu0 %v135
    %202 = vmatmul.bf16.gmra.mxu0 %v150
    %v203 = vpop.f32.mrf.mxu0
    %v204 = vadd.f32 %v98, %v203
    %v205 = vpop.f32.mrf.mxu0
    %v206 = vadd.f32 %v98, %v205
    %207 = vdwg.mxu0
    %v208 = vtanh.pop %v162
    %v209 = vtanh.pop %v176
    %v210 = vtanh.pop %v190
    %v211 = vtanh.pop %v204
    %v212 = vtanh.pop %v164
    %v213 = vtanh.pop %v178
    %v214 = vtanh.pop %v192
    %v215 = vtanh.pop %v206
    %v216 = vpack.c.bf16 %v212, %v208
    %v217 = vpack.c.bf16 %v213, %v209
    %v218 = vpack.c.bf16 %v214, %v210
    %v219 = vpack.c.bf16 %v215, %v211
    %v220 = vld [vmem:[#allocation8] sm:$0xf]
    %v221 = vld [vmem:[#allocation8 + $0x4] sm:$0xf]
    %v222 = vld [vmem:[#allocation8 + $0x8] sm:$0xf]
    %v223 = vld [vmem:[#allocation8 + $0xc] sm:$0xf]
    %v224 = vld [vmem:[#allocation8 + $0x10] sm:$0xf]
    %v225 = vld [vmem:[#allocation8 + $0x14] sm:$0xf]
    %v226 = vld [vmem:[#allocation8 + $0x18] sm:$0xf]
    %v227 = vld [vmem:[#allocation8 + $0x1c] sm:$0xf]
    %v228 = vld [vmem:[#allocation8 + $0x20] sm:$0xf]
    %v229 = vld [vmem:[#allocation8 + $0x24] sm:$0xf]
    %v230 = vld [vmem:[#allocation8 + $0x28] sm:$0xf]
    %v231 = vld [vmem:[#allocation8 + $0x2c] sm:$0xf]
    %v232 = vld [vmem:[#allocation8 + $0x30] sm:$0xf]
    %v233 = vld [vmem:[#allocation8 + $0x34] sm:$0xf]
    %v234 = vld [vmem:[#allocation8 + $0x38] sm:$0xf]
    %v235 = vld [vmem:[#allocation8 + $0x3c] sm:$0xf]
    %v236 = vld [vmem:[#allocation8 + $0x40] sm:$0xf]
    %v237 = vld [vmem:[#allocation8 + $0x44] sm:$0xf]
    %v238 = vld [vmem:[#allocation8 + $0x48] sm:$0xf]
    %v239 = vld [vmem:[#allocation8 + $0x4c] sm:$0xf]
    %v240 = vld [vmem:[#allocation8 + $0x50] sm:$0xf]
    %v241 = vld [vmem:[#allocation8 + $0x54] sm:$0xf]
    %v242 = vld [vmem:[#allocation8 + $0x58] sm:$0xf]
    %v243 = vld [vmem:[#allocation8 + $0x5c] sm:$0xf]
    %v244 = vld [vmem:[#allocation8 + $0x60] sm:$0xf]
    %v245 = vld [vmem:[#allocation8 + $0x64] sm:$0xf]
    %v246 = vld [vmem:[#allocation8 + $0x68] sm:$0xf]
    %v247 = vld [vmem:[#allocation8 + $0x6c] sm:$0xf]
    %v248 = vld [vmem:[#allocation8 + $0x70] sm:$0xf]
    %v249 = vld [vmem:[#allocation8 + $0x74] sm:$0xf]
    %v250 = vld [vmem:[#allocation8 + $0x78] sm:$0xf]
    %v251 = vld [vmem:[#allocation8 + $0x7c] sm:$0xf]
    %v252 = vld [vmem:[#allocation8 + $0x80] sm:$0xf]
    %v253 = vld [vmem:[#allocation8 + $0x84] sm:$0xf]
    %v254 = vld [vmem:[#allocation8 + $0x88] sm:$0xf]
    %v255 = vld [vmem:[#allocation8 + $0x8c] sm:$0xf]
    %v256 = vld [vmem:[#allocation8 + $0x90] sm:$0xf]
    %v257 = vld [vmem:[#allocation8 + $0x94] sm:$0xf]
    %v258 = vld [vmem:[#allocation8 + $0x98] sm:$0xf]
    %v259 = vld [vmem:[#allocation8 + $0x9c] sm:$0xf]
    %v260 = vld [vmem:[#allocation8 + $0xa0] sm:$0xf]
    %v261 = vld [vmem:[#allocation8 + $0xa4] sm:$0xf]
    %v262 = vld [vmem:[#allocation8 + $0xa8] sm:$0xf]
    %v263 = vld [vmem:[#allocation8 + $0xac] sm:$0xf]
    %v264 = vld [vmem:[#allocation8 + $0xb0] sm:$0xf]
    %v265 = vld [vmem:[#allocation8 + $0xb4] sm:$0xf]
    %v266 = vld [vmem:[#allocation8 + $0xb8] sm:$0xf]
    %v267 = vld [vmem:[#allocation8 + $0xbc] sm:$0xf]
    %v268 = vld [vmem:[#allocation8 + $0xc0] sm:$0xf]
    %v269 = vld [vmem:[#allocation8 + $0xc4] sm:$0xf]
    %v270 = vld [vmem:[#allocation8 + $0xc8] sm:$0xf]
    %v271 = vld [vmem:[#allocation8 + $0xcc] sm:$0xf]
    %v272 = vld [vmem:[#allocation8 + $0xd0] sm:$0xf]
    %v273 = vld [vmem:[#allocation8 + $0xd4] sm:$0xf]
    %v274 = vld [vmem:[#allocation8 + $0xd8] sm:$0xf]
    %v275 = vld [vmem:[#allocation8 + $0xdc] sm:$0xf]
    %v276 = vld [vmem:[#allocation8 + $0xe0] sm:$0xf]
    %v277 = vld [vmem:[#allocation8 + $0xe4] sm:$0xf]
    %v278 = vld [vmem:[#allocation8 + $0xe8] sm:$0xf]
    %v279 = vld [vmem:[#allocation8 + $0xec] sm:$0xf]
    %v280 = vld [vmem:[#allocation8 + $0xf0] sm:$0xf]
    %v281 = vld [vmem:[#allocation8 + $0xf4] sm:$0xf]
    %v282 = vld [vmem:[#allocation8 + $0xf8] sm:$0xf]
    %v283 = vld [vmem:[#allocation8 + $0xfc] sm:$0xf]
    %v284 = vld [vmem:[%s4] sm:$0x1]
    %v286 = vperm.slane %v284, 0
    %v352 = vunpack.c.l.b16 %v220
    %v353 = vunpack.c.l.b16 %v221
    %v354 = vunpack.c.l.b16 %v222
    %v355 = vunpack.c.l.b16 %v223
    %v356 = vunpack.c.l.b16 %v224
    %v357 = vunpack.c.l.b16 %v225
    %v358 = vunpack.c.l.b16 %v226
    %v359 = vunpack.c.l.b16 %v227
    %v360 = vunpack.c.l.b16 %v228
    %v361 = vunpack.c.l.b16 %v229
    %v362 = vunpack.c.l.b16 %v230
    %v363 = vunpack.c.l.b16 %v231
    %v364 = vunpack.c.l.b16 %v232
    %v365 = vunpack.c.l.b16 %v233
    %v366 = vunpack.c.l.b16 %v234
    %v367 = vunpack.c.l.b16 %v235
    %v368 = vunpack.c.l.b16 %v236
    %v369 = vunpack.c.l.b16 %v237
    %v370 = vunpack.c.l.b16 %v238
    %v371 = vunpack.c.l.b16 %v239
    %v372 = vunpack.c.l.b16 %v240
    %v373 = vunpack.c.l.b16 %v241
    %v374 = vunpack.c.l.b16 %v242
    %v375 = vunpack.c.l.b16 %v243
    %v376 = vunpack.c.l.b16 %v244
    %v377 = vunpack.c.l.b16 %v245
    %v378 = vunpack.c.l.b16 %v246
    %v379 = vunpack.c.l.b16 %v247
    %v380 = vunpack.c.l.b16 %v248
    %v381 = vunpack.c.l.b16 %v249
    %v382 = vunpack.c.l.b16 %v250
    %v383 = vunpack.c.l.b16 %v251
    %v384 = vunpack.c.l.b16 %v252
    %v385 = vunpack.c.l.b16 %v253
    %v386 = vunpack.c.l.b16 %v254
    %v387 = vunpack.c.l.b16 %v255
    %v388 = vunpack.c.l.b16 %v256
    %v389 = vunpack.c.l.b16 %v257
    %v390 = vunpack.c.l.b16 %v258
    %v391 = vunpack.c.l.b16 %v259
    %v392 = vunpack.c.l.b16 %v260
    %v393 = vunpack.c.l.b16 %v261
    %v394 = vunpack.c.l.b16 %v262
    %v395 = vunpack.c.l.b16 %v263
    %v396 = vunpack.c.l.b16 %v264
    %v397 = vunpack.c.l.b16 %v265
    %v398 = vunpack.c.l.b16 %v266
    %v399 = vunpack.c.l.b16 %v267
    %v400 = vunpack.c.l.b16 %v268
    %v401 = vunpack.c.l.b16 %v269
    %v402 = vunpack.c.l.b16 %v270
    %v403 = vunpack.c.l.b16 %v271
    %v404 = vunpack.c.l.b16 %v272
    %v405 = vunpack.c.l.b16 %v273
    %v406 = vunpack.c.l.b16 %v274
    %v407 = vunpack.c.l.b16 %v275
    %v408 = vunpack.c.l.b16 %v276
    %v409 = vunpack.c.l.b16 %v277
    %v410 = vunpack.c.l.b16 %v278
    %v411 = vunpack.c.l.b16 %v279
    %v412 = vunpack.c.l.b16 %v280
    %v413 = vunpack.c.l.b16 %v281
    %v414 = vunpack.c.l.b16 %v282
    %v415 = vunpack.c.l.b16 %v283
    %v416 = vpack.c.b16 %v353, %v352
    %v417 = vpack.c.b16 %v355, %v354
    %v418 = vpack.c.b16 %v357, %v356
    %v419 = vpack.c.b16 %v359, %v358
    %v420 = vpack.c.b16 %v361, %v360
    %v421 = vpack.c.b16 %v363, %v362
    %v422 = vpack.c.b16 %v365, %v364
    %v423 = vpack.c.b16 %v367, %v366
    %v424 = vpack.c.b16 %v369, %v368
    %v425 = vpack.c.b16 %v371, %v370
    %v426 = vpack.c.b16 %v373, %v372
    %v427 = vpack.c.b16 %v375, %v374
    %v428 = vpack.c.b16 %v377, %v376
    %v429 = vpack.c.b16 %v379, %v378
    %v430 = vpack.c.b16 %v381, %v380
    %v431 = vpack.c.b16 %v383, %v382
    %v432 = vpack.c.b16 %v385, %v384
    %v433 = vpack.c.b16 %v387, %v386
    %v434 = vpack.c.b16 %v389, %v388
    %v435 = vpack.c.b16 %v391, %v390
    %v436 = vpack.c.b16 %v393, %v392
    %v437 = vpack.c.b16 %v395, %v394
    %v438 = vpack.c.b16 %v397, %v396
    %v439 = vpack.c.b16 %v399, %v398
    %v440 = vpack.c.b16 %v401, %v400
    %v441 = vpack.c.b16 %v403, %v402
    %v442 = vpack.c.b16 %v405, %v404
    %v443 = vpack.c.b16 %v407, %v406
    %v444 = vpack.c.b16 %v409, %v408
    %v445 = vpack.c.b16 %v411, %v410
    %v446 = vpack.c.b16 %v413, %v412
    %v447 = vpack.c.b16 %v415, %v414
    %480 = vmatpush.bf16.msra.mxu0 %v423
    %481 = vmatpush.bf16.msra.mxu0 %v422
    %482 = vmatpush.bf16.msra.mxu0 %v421
    %483 = vmatpush.bf16.msra.mxu0 %v420
    %484 = vmatpush.bf16.msra.mxu0 %v419
    %485 = vmatpush.bf16.msra.mxu0 %v418
    %486 = vmatpush.bf16.msra.mxu0 %v417
    %487 = vmatpush.bf16.msra.mxu0 %v416
    %488 = vmatmul.bf16.gmra.mxu0 %v216
    %v489 = vpop.f32.mrf.mxu0
    %v490 = vadd.f32 %v286, %v489
    %v491 = vpop.f32.mrf.mxu0
    %v492 = vadd.f32 %v286, %v491
    %493 = vdwg.mxu0
    %494 = vmatpush.bf16.msra.mxu0 %v431
    %495 = vmatpush.bf16.msra.mxu0 %v430
    %496 = vmatpush.bf16.msra.mxu0 %v429
    %497 = vmatpush.bf16.msra.mxu0 %v428
    %498 = vmatpush.bf16.msra.mxu0 %v427
    %499 = vmatpush.bf16.msra.mxu0 %v426
    %500 = vmatpush.bf16.msra.mxu0 %v425
    %501 = vmatpush.bf16.msra.mxu0 %v424
    %502 = vmatmul.bf16.gmra.mxu0 %v217
    %v503 = vpop.f32.mrf.mxu0
    %v504 = vadd.f32 %v490, %v503
    %v505 = vpop.f32.mrf.mxu0
    %v506 = vadd.f32 %v492, %v505
    %507 = vdwg.mxu0
    %508 = vmatpush.bf16.msra.mxu0 %v439
    %509 = vmatpush.bf16.msra.mxu0 %v438
    %510 = vmatpush.bf16.msra.mxu0 %v437
    %511 = vmatpush.bf16.msra.mxu0 %v436
    %512 = vmatpush.bf16.msra.mxu0 %v435
    %513 = vmatpush.bf16.msra.mxu0 %v434
    %514 = vmatpush.bf16.msra.mxu0 %v433
    %515 = vmatpush.bf16.msra.mxu0 %v432
    %516 = vmatmul.bf16.gmra.mxu0 %v218
    %v517 = vpop.f32.mrf.mxu0
    %v518 = vadd.f32 %v504, %v517
    %v519 = vpop.f32.mrf.mxu0
    %v520 = vadd.f32 %v506, %v519
    %521 = vdwg.mxu0
    %522 = vmatpush.bf16.msra.mxu0 %v447
    %523 = vmatpush.bf16.msra.mxu0 %v446
    %524 = vmatpush.bf16.msra.mxu0 %v445
    %525 = vmatpush.bf16.msra.mxu0 %v444
    %526 = vmatpush.bf16.msra.mxu0 %v443
    %527 = vmatpush.bf16.msra.mxu0 %v442
    %528 = vmatpush.bf16.msra.mxu0 %v441
    %529 = vmatpush.bf16.msra.mxu0 %v440
    %530 = vmatmul.bf16.gmra.mxu0 %v219
    %v531 = vpop.f32.mrf.mxu0
    %v532 = vadd.f32 %v518, %v531
    %v533 = vpop.f32.mrf.mxu0
    %v534 = vadd.f32 %v520, %v533
    %535 = vdwg.mxu0
    %v536 = vlaneseq
    %v537 = vand.u32 %v536, 127
    %vm538 = vcmp.lt.s32.totalorder %v537, 8
    %vm539 = vcmp.ge.s32.totalorder %v537, 8
    %vm540 = vcmp.lt.s32.totalorder %v537, 16
    %vm541 = vmand %vm539, %vm540
    %v542 = vsel %vm538, %v532, -1e+30
    %v543 = vsel %vm538, %v534, -1e+30
    %544 = vmax.xlane.f32.xlu0 %v542
    %v545 = vpop.xlane.xlu0 %544
    %546 = vmax.xlane.f32.xlu0 %v543
    %v547 = vpop.xlane.xlu0 %546
    %v548 = vsub.f32 %v542, %v545
    %v549 = vsub.f32 %v543, %v547
    %v550 = vmul.f32 %v548, 1.442695
    %v551 = vpow.pop %v550
    %v552 = vmul.f32 %v549, 1.442695
    %v553 = vpow.pop %v552
    %554 = vadd.xlane.f32.xlu0 %v551
    %v555 = vpop.xlane.xlu0 %554
    %556 = vadd.xlane.f32.xlu0 %v553
    %v557 = vpop.xlane.xlu0 %556
    %v558 = vrcp.pop %v555
    %v559 = vmul.f32 %v555, %v558
    %v560 = vsub.f32 1.0, %v559
    %v561 = vmul.f32 %v558, %v560
    %v562 = vadd.f32 %v558, %v561
    %vm563 = vweird.f32 %v555
    %vm564 = vweird.f32 %v558
    %vm565 = vmor %vm563, %vm564
    %v566 = vsel %vm565, %v558, %v562
    %v567 = vand.u32 2147483647, %v555
    %vm568 = vcmp.eq.f32.partialorder %v567, 8.507059e+37
    %v569 = vand.u32 %v555, 2147483648
    %v570 = vor.u32 1.1754944e-38, %v569
    %v571 = vsel %vm568, %v570, %v566
    %v572 = vmul.f32 %v551, %v571
    %v573 = vrcp.pop %v557
    %v574 = vmul.f32 %v557, %v573
    %v575 = vsub.f32 1.0, %v574
    %v576 = vmul.f32 %v573, %v575
    %v577 = vadd.f32 %v573, %v576
    %vm578 = vweird.f32 %v557
    %vm579 = vweird.f32 %v573
    %vm580 = vmor %vm578, %vm579
    %v581 = vsel %vm580, %v573, %v577
    %v582 = vand.u32 2147483647, %v557
    %vm583 = vcmp.eq.f32.partialorder %v582, 8.507059e+37
    %v584 = vand.u32 %v557, 2147483648
    %v585 = vor.u32 1.1754944e-38, %v584
    %v586 = vsel %vm583, %v585, %v581
    %v587 = vmul.f32 %v553, %v586
    %v588 = vsel %vm541, %v532, 0.0
    %v589 = vsel %vm541, %v534, 0.0
    %592 = vrot.lane.b32.xlu0 %v532, 120
    %v593 = vpop.permute.xlu0 %592
    %594 = vrot.lane.b32.xlu0 %v534, 120
    %v595 = vpop.permute.xlu0 %594
    %v598 = vmul.f32 %v572, %v593
    %v599 = vmul.f32 %v587, %v595
    %vm600 = vcmask 64512
    %v601 = vsel %vm600, %v598, 0.0
    %602 = vadd.xlane.f32.xlu0 %v601
    %v603 = vpop.xlane.xlu0 %602
    %v604 = vsel %vm600, %v599, 0.0
    %605 = vadd.xlane.f32.xlu0 %v604
    %v606 = vpop.xlane.xlu0 %605
    %v607 = vadd.f32 %v572, %v588
    %v608 = vadd.f32 %v587, %v589
    %vm609 = vcmp.eq.s32.totalorder %v537, 16
    %v610 = vsel %vm609, %v603, 0.0
    %v611 = vsel %vm609, %v606, 0.0
    %v612 = vadd.f32 %v607, %v610
    %v613 = vadd.f32 %v608, %v611
    %v614 = vpack.c.bf16 %v612, %v612
    %v615 = vpack.c.bf16 %v613, %v613
    %616 = vst [vmem:[#allocation10] sm:$0xf] %v614
    %617 = vst [vmem:[#allocation10 + $0x4] sm:$0xf] %v615
    // Predicated region
    $region38: #{tpu_custom_call.1} parent=1 // pred_check
      _
    $region39: #{tpu_custom_call.1} parent=1 // pred_check_branch
      %619 = sbr.rel (0) target = $region41
    $region40: #{tpu_custom_call.1} parent=1 // pred_region
      %621 = vsyncadd [#allocation4], 0
      %s622 = sshll.u32 [#allocation10], 4
      %s623 = int_to_ptr.vmem [resolvable:$true] %s622
      %s624 = sshll.u32 %s5, 4
      %s625 = int_to_ptr.hbm [resolvable:$true] %s624
      %630 = dma.vmem_to_hbm [thread:$0]  %s623, 128, %s625, [#allocation4], 64, 64, 4
    $region41: #{tpu_custom_call.1} parent=1 // pred_fallthru
      _
    // Predicated region
    $region42: #{tpu_custom_call.1} parent=1 // pred_check
      _
    $region43: #{tpu_custom_call.1} parent=1 // pred_check_branch
      %632 = sbr.rel (0) target = $region45
    $region44: #{tpu_custom_call.1} parent=1 // pred_region
      %634 = dma.done [#allocation4], 128
    $region45: #{tpu_custom_call.1} parent=1 // pred_fallthru
      _
    %635 = vsyncpa [#allocation3], 1
    %636 = vsyncpa [#allocation6], 1
    %637 = vsyncpa [#allocation9], 1
    %638 = vsyncpa [#allocation4], 1

</llo_original>
